<compile_context>
chip_gen: v5e
topology: v5e:2x2
jax: 0.10.0
libtpu: 0.0.40
codegen_flags: <defaults>
</compile_context>

<pallas_src>
import functools

import jax
import jax.numpy as jnp
from jax.experimental import pallas as pl
from jax.experimental.pallas import tpu as pltpu


def _round_up(n, m):
    return ((n + m - 1) // m) * m


def _mlp_kernel(n_layers, compute_dtype, x_ref, w_ref, b_ref, o_ref):
    """Whole MLP on one lane-dense batch tile.

    x_ref: (1, Bt)    input scalars, batch on lanes.
    w_ref: (L, D, D)  zero-padded weight slab.
                      layers 0..L-2 stored transposed (out, in);
                      layer L-1 stored as an un-transposed (in, 1) column.
    b_ref: (L, D, 1)  zero-padded column biases (always f32).
    o_ref: (1, Bt)    output scalars, batch on lanes.
    """
    x = x_ref[...]  # (1, Bt) f32

    if n_layers == 1:
        # Degenerate model (features == []): a single Linear(1, 1).
        o_ref[...] = (w_ref[0, 0:1, 0:1] * x + b_ref[0, 0:1, 0:1]).astype(o_ref.dtype)
        return

    # Layer 0: in_dim == 1 -> outer product on the VPU (an MXU matmul would
    # waste a full push/pop round trip on a depth-1 contraction).
    h = w_ref[0, :, 0:1] * x + b_ref[0]  # (D, Bt) f32 (padded rows stay 0)

    # Hidden layers 1 .. L-2: tanh (EUP) then MXU matmul, f32 accumulation.
    for l in range(1, n_layers - 1):
        a = jnp.tanh(h.astype(compute_dtype))            # tanh(0)=0 keeps padding inert
        h = jnp.dot(w_ref[l], a, preferred_element_type=jnp.float32) + b_ref[l]

    # Final layer (out_dim == 1): VPU multiply + sublane reduce on the XLU,
    # no M=1 MXU pass.  Padded rows of w_col are 0 so they contribute nothing.
    a = jnp.tanh(h.astype(compute_dtype))
    w_col = w_ref[n_layers - 1, :, 0:1]                   # (D, 1)
    out = jnp.sum(w_col.astype(jnp.float32) * a.astype(jnp.float32),
                  axis=0, keepdims=True)                  # (1, Bt)
    out = out + b_ref[n_layers - 1, 0:1, 0:1]
    o_ref[...] = out.astype(o_ref.dtype)


def pack_params(params, *, param_dtype=jnp.float32):
    """Pack per-layer (W, b), W: (in, out), b: (1, out), into padded slabs.

    Layers 0..L-2 are stored transposed (out, in) so the kernel computes
    h_out = W_slab[l] @ h_in + b_slab[l] on (feature, batch) activations.
    The last layer (out_dim == 1) is stored as an un-transposed (in, 1)
    column so the kernel can do a VPU multiply + sublane reduce.
    """
    dims = [params[0][0].shape[0]] + [w.shape[1] for (w, _) in params]
    D = max(8, _round_up(max(dims), 8))   # do NOT pad to 128 (see header)
    L = len(params)
    w_slab = jnp.zeros((L, D, D), param_dtype)
    b_slab = jnp.zeros((L, D, 1), jnp.float32)
    for l, (w, b) in enumerate(params):
        in_dim, out_dim = w.shape
        if l == L - 1 and L > 1:
            assert out_dim == 1, "LinearModel always ends in Linear(d, 1)"
            w_slab = w_slab.at[l, :in_dim, 0].set(w[:, 0].astype(param_dtype))
        else:
            w_slab = w_slab.at[l, :out_dim, :in_dim].set(w.T.astype(param_dtype))
        b_slab = b_slab.at[l, :out_dim, 0].set(b.reshape(-1).astype(jnp.float32))
    return w_slab, b_slab


def _choose_batch_tile(B, compute_dtype):
    """Lane-dense batch tile: big (fewer, fatter grid steps; bigger DMAs) but
    under the vreg budget for the resident (D, Bt) activation, and >=2 grid
    steps when possible so v7x's two TensorCores both get work."""
    max_tile = 1024 if compute_dtype == jnp.bfloat16 else 512
    if B <= 128:
        return 128
    half = _round_up((B + 1) // 2, 128)   # ceil(B/2) rounded up to a lane tile
    return int(min(max_tile, half))


def linear_model_forward(x, params, *, batch_tile=None, compute_dtype=jnp.float32):
    """Run the MLP forward pass with a Pallas TPU kernel.

    Args:
      x: (B, 1) float32 input (the scalar t).
      params: list of (W, b) with W: (in_dim, out_dim), b: (1, out_dim).
      batch_tile: lane-dense batch tile (multiple of 128). Default: auto.
      compute_dtype: dtype for tanh inputs / matmul operands (f32 or bf16).

    Returns:
      (B, 1) float32 output.
    """
    B, in_dim = x.shape
    assert in_dim == 1
    if batch_tile is None:
        batch_tile = _choose_batch_tile(B, compute_dtype)
    assert batch_tile % 128 == 0, "batch tile must be lane-dense (multiple of 128)"

    # Pad the batch up to a tile multiple (padded lanes are computed on zeros
    # and discarded), so any B works.
    B_pad = _round_up(B, batch_tile)

    n_layers = len(params)
    w_slab, b_slab = pack_params(params, param_dtype=compute_dtype)
    L, D, _ = w_slab.shape

    x_row = x.reshape(1, B).astype(jnp.float32)            # batch -> lanes
    if B_pad != B:
        x_row = jnp.pad(x_row, ((0, 0), (0, B_pad - B)))

    grid = (B_pad // batch_tile,)

    # Advisory cost estimate for XLA's scheduler.
    dims = [1] + [w.shape[1] for (w, _) in params]
    flops = 2 * B_pad * sum(a * b for a, b in zip(dims[:-1], dims[1:]))
    transcendentals = B_pad * sum(dims[1:-1])
    bytes_accessed = (4 * 2 * B_pad
                      + int(w_slab.size) * w_slab.dtype.itemsize
                      + int(b_slab.size) * 4)

    kernel = functools.partial(_mlp_kernel, n_layers, compute_dtype)

    out_row = pl.pallas_call(
        kernel,
        out_shape=jax.ShapeDtypeStruct((1, B_pad), jnp.float32),
        grid_spec=pltpu.PrefetchScalarGridSpec(
            num_scalar_prefetch=0,
            grid=grid,
            in_specs=[
                pl.BlockSpec((1, batch_tile), lambda i: (0, i)),
                pl.BlockSpec((L, D, D), lambda i: (0, 0, 0)),  # resident weight slab
                pl.BlockSpec((L, D, 1), lambda i: (0, 0, 0)),  # resident bias slab
            ],
            out_specs=pl.BlockSpec((1, batch_tile), lambda i: (0, i)),
        ),
        compiler_params=pltpu.CompilerParams(
            dimension_semantics=("parallel",),  # batch tiles independent (megacore)
        ),
        cost_estimate=pl.CostEstimate(
            flops=flops,
            transcendentals=transcendentals,
            bytes_accessed=bytes_accessed,
        ),
    )(x_row, w_slab, b_slab)

    return out_row[:, :B].reshape(B, 1)


def init_params(features, key):
    """Deterministic init mimicking nn.Linear's U(-1/sqrt(fan_in), 1/sqrt(fan_in))."""
    dims = [1] + list(features) + [1]
    params = []
    for in_dim, out_dim in zip(dims[:-1], dims[1:]):
        key, kw, kb = jax.random.split(key, 3)
        bound = 1.0 / (in_dim ** 0.5)
        w = jax.random.uniform(kw, (in_dim, out_dim), jnp.float32, -bound, bound)
        b = jax.random.uniform(kb, (1, out_dim), jnp.float32, -bound, bound)
        params.append((w, b))
    return params


def reference_forward(x, params):
    """Pure-JAX reference for correctness checking."""
    h = x
    for l, (w, b) in enumerate(params):
        h = h @ w + b
        if l < len(params) - 1:
            h = jnp.tanh(h)
    return h


if __name__ == "__main__":
    key = jax.random.PRNGKey(0)
    features = [32, 32]   # two hidden layers of width 32
    B = 1024              # -> batch_tile=512, grid=(2,): fat tiles, 2 parallel steps

    k_in, k_par = jax.random.split(key)
    t = jax.random.uniform(k_in, (B, 1), jnp.float32, -1.0, 1.0)
    params = init_params(features, k_par)
    ref = reference_forward(t, params)

    # Default f32 path: tight correctness check.
    out = jax.block_until_ready(linear_model_forward(t, params))
    assert out.shape == (B, 1)
    assert jnp.allclose(out, ref, atol=1e-5, rtol=1e-5), "f32 mismatch vs reference"

    # Ragged batch (not a multiple of 128): handled by wrapper-side padding.
    t_ragged = t[:300]
    out_ragged = jax.block_until_ready(linear_model_forward(t_ragged, params))
    assert out_ragged.shape == (300, 1)
    assert jnp.allclose(out_ragged, ref[:300], atol=1e-5, rtol=1e-5), "ragged mismatch"

    # bf16 tanh/matmul-operand path (v6e/v7x recipe): looser tolerance.
    out_bf16 = jax.block_until_ready(
        linear_model_forward(t, params, compute_dtype=jnp.bfloat16))
    assert jnp.allclose(out_bf16, ref, atol=5e-2, rtol=5e-2), "bf16 mismatch"

    print("KERNEL_OK")
</pallas_src>

<mosaic_0001>
module attributes {stable_mosaic.version = 11 : i64} {
  func.func @_mlp_kernel(%arg0: i32, %arg1: memref<1x512xf32, #tpu.memory_space<vmem>>, %arg2: memref<3x32x32xf32, #tpu.memory_space<vmem>>, %arg3: memref<3x32x1xf32, #tpu.memory_space<vmem>>, %arg4: memref<1x512xf32, #tpu.memory_space<vmem>>) attributes {dimension_semantics = [#tpu.dimension_semantics<parallel>], iteration_bounds = array<i64: 2>, scalar_prefetch = 0 : i64, scratch_operands = 0 : i64, tpu.core_type = #tpu.core_type<tc>, window_params = [{transform_indices = @transform_0, window_bounds = array<i64: 1, 512>}, {pipeline_mode = #tpu.pipeline_mode<synchronous>, transform_indices = @transform_1, window_bounds = array<i64: 3, 32, 32>}, {pipeline_mode = #tpu.pipeline_mode<synchronous>, transform_indices = @transform_2, window_bounds = array<i64: 3, 32, 1>}, {transform_indices = @transform_3, window_bounds = array<i64: 1, 512>}]} {
    %c0 = arith.constant 0 : index
    %c0_0 = arith.constant 0 : index
    %0 = vector.load %arg1[%c0, %c0_0] : memref<1x512xf32, #tpu.memory_space<vmem>>, vector<1x512xf32>
    %c0_1 = arith.constant 0 : index
    %c0_2 = arith.constant 0 : index
    %c0_3 = arith.constant 0 : index
    %1 = vector.load %arg2[%c0_1, %c0_2, %c0_3] : memref<3x32x32xf32, #tpu.memory_space<vmem>>, vector<1x32x1xf32>
    %2 = vector.shape_cast %1 : vector<1x32x1xf32> to vector<32x1xf32>
    %3 = vector.broadcast %2 : vector<32x1xf32> to vector<32x512xf32>
    %4 = vector.broadcast %0 : vector<1x512xf32> to vector<32x512xf32>
    %5 = arith.mulf %3, %4 : vector<32x512xf32>
    %c0_4 = arith.constant 0 : index
    %c0_5 = arith.constant 0 : index
    %c0_6 = arith.constant 0 : index
    %6 = vector.load %arg3[%c0_4, %c0_5, %c0_6] : memref<3x32x1xf32, #tpu.memory_space<vmem>>, vector<1x32x1xf32>
    %7 = vector.shape_cast %6 : vector<1x32x1xf32> to vector<32x1xf32>
    %8 = vector.broadcast %7 : vector<32x1xf32> to vector<32x512xf32>
    %9 = arith.addf %5, %8 : vector<32x512xf32>
    %10 = math.tanh %9 : vector<32x512xf32>
    %c1 = arith.constant 1 : index
    %c0_7 = arith.constant 0 : index
    %c0_8 = arith.constant 0 : index
    %11 = vector.load %arg2[%c1, %c0_7, %c0_8] : memref<3x32x32xf32, #tpu.memory_space<vmem>>, vector<1x32x32xf32>
    %12 = vector.shape_cast %11 : vector<1x32x32xf32> to vector<32x32xf32>
    %cst = arith.constant dense<0.000000e+00> : vector<32x512xf32>
    %13 = tpu.matmul %12, %10, %cst {dimension_numbers = #tpu.dot_dimension_numbers<[1], [0], [0], [1], [0, 0, 1, 1], [], []>} : vector<32x32xf32>, vector<32x512xf32>, vector<32x512xf32> -> vector<32x512xf32>
    %c1_9 = arith.constant 1 : index
    %c0_10 = arith.constant 0 : index
    %c0_11 = arith.constant 0 : index
    %14 = vector.load %arg3[%c1_9, %c0_10, %c0_11] : memref<3x32x1xf32, #tpu.memory_space<vmem>>, vector<1x32x1xf32>
    %15 = vector.shape_cast %14 : vector<1x32x1xf32> to vector<32x1xf32>
    %16 = vector.broadcast %15 : vector<32x1xf32> to vector<32x512xf32>
    %17 = arith.addf %13, %16 : vector<32x512xf32>
    %18 = math.tanh %17 : vector<32x512xf32>
    %c2 = arith.constant 2 : index
    %c0_12 = arith.constant 0 : index
    %c0_13 = arith.constant 0 : index
    %19 = vector.load %arg2[%c2, %c0_12, %c0_13] : memref<3x32x32xf32, #tpu.memory_space<vmem>>, vector<1x32x1xf32>
    %20 = vector.shape_cast %19 : vector<1x32x1xf32> to vector<32x1xf32>
    %21 = vector.broadcast %20 : vector<32x1xf32> to vector<32x512xf32>
    %22 = arith.mulf %21, %18 : vector<32x512xf32>
    %cst_14 = arith.constant dense<0.000000e+00> : vector<512xf32>
    %23 = vector.multi_reduction <add>, %22, %cst_14 [0] : vector<32x512xf32> to vector<512xf32>
    %24 = vector.shape_cast %23 : vector<512xf32> to vector<1x512xf32>
    %c2_15 = arith.constant 2 : index
    %c0_16 = arith.constant 0 : index
    %c0_17 = arith.constant 0 : index
    %25 = vector.load %arg3[%c2_15, %c0_16, %c0_17] : memref<3x32x1xf32, #tpu.memory_space<vmem>>, vector<1x1x1xf32>
    %26 = vector.shape_cast %25 : vector<1x1x1xf32> to vector<1x1xf32>
    %27 = vector.broadcast %26 : vector<1x1xf32> to vector<1x512xf32>
    %28 = arith.addf %24, %27 : vector<1x512xf32>
    %c0_18 = arith.constant 0 : index
    %c0_19 = arith.constant 0 : index
    %29 = vector.load %arg4[%c0_18, %c0_19] : memref<1x512xf32, #tpu.memory_space<vmem>>, vector<1x512xf32>
    tpu.vector_store %arg4[%c0_18, %c0_19], %28 {strides = array<i32>} : memref<1x512xf32, #tpu.memory_space<vmem>>, vector<1x512xf32>,
    return
  }
  func.func @transform_0(%arg0: i32) -> (i32, i32) {
    %c0_i32 = arith.constant 0 : i32
    %c0_i32_0 = arith.constant 0 : i32
    return %c0_i32, %arg0 : i32, i32
  }
  func.func @transform_1(%arg0: i32) -> (i32, i32, i32) {
    %c0_i32 = arith.constant 0 : i32
    %c0_i32_0 = arith.constant 0 : i32
    %c0_i32_1 = arith.constant 0 : i32
    %c0_i32_2 = arith.constant 0 : i32
    return %c0_i32, %c0_i32_0, %c0_i32_1 : i32, i32, i32
  }
  func.func @transform_2(%arg0: i32) -> (i32, i32, i32) {
    %c0_i32 = arith.constant 0 : i32
    %c0_i32_0 = arith.constant 0 : i32
    %c0_i32_1 = arith.constant 0 : i32
    %c0_i32_2 = arith.constant 0 : i32
    return %c0_i32, %c0_i32_0, %c0_i32_1 : i32, i32, i32
  }
  func.func @transform_3(%arg0: i32) -> (i32, i32) {
    %c0_i32 = arith.constant 0 : i32
    %c0_i32_0 = arith.constant 0 : i32
    return %c0_i32, %arg0 : i32, i32
  }
}

</mosaic_0001>

<llo_original>
// kernel: tpu_custom_call.1
$region0: #{tpu_custom_call.1}
  #allocation0 [shape = 'u32[]', space=smem, size = 0x4, offset = 0x4, fixed_abs, tag = 'smem constant byte address 0x4 - core index']
  #allocation1 [shape = 'u32[72,128]{1,0:T(1,128)}', space=vmem, size = 0x9000, scoped, tag = 'internal scratch']
  %s0 = inlined_call_operand.hbm [shape: f32[1,1024], index: 0, kind: input, shape index: {}]
  %s1 = inlined_call_operand.vmem [shape: f32[3,32,32], index: 1, kind: input, shape index: {}]
  %s2 = inlined_call_operand.vmem [shape: f32[3,32,1], index: 2, kind: input, shape index: {}]
  %s3 = inlined_call_operand.hbm [shape: f32[1,1024], index: 3, kind: output, shape index: {}]
  %s4 = sld [smem:[#allocation0]]
  $region49: #{tpu_custom_call.1} parent=0
    _
  %s6 = ssub.s32 1, %s4
  %s7 = scalar_select 0, %s6, %s4
  $region1: #{tpu_custom_call.1} parent=0
    #allocation2 [shape = 'u8[4096]{0}', space=vmem, size = 0x1000, scoped, tag = 'input window, operand 0']
    #allocation3 [shape = 's32[2]{0}', space=sflag, size = 0x8, scoped, tag = 'scoped memory for tpu_custom_call.1']
    #allocation4 [shape = 's32[2]{0}', space=sflag, size = 0x8, scoped, tag = 'scoped memory for tpu_custom_call.1']
    #allocation5 [shape = 'u8[4096]{0}', space=vmem, size = 0x1000, scoped, tag = 'output window, operand 0']
    %8 = vsyncpa [#allocation3], 0
    %s9 = scalar_lea.sflag [#allocation3], 1
    %10 = vsyncpa %s9, 0
    %11 = vsyncpa [#allocation4], 0
    %s12 = scalar_lea.sflag [#allocation4], 1
    %13 = vsyncpa %s12, 0
    loop: start=0, step=1, limit=4
    $region2: #{tpu_custom_call.1} parent=1 // loop_pre_header
      _
    $region3: #{tpu_custom_call.1} parent=1 // loop_header
      %s15 = sphi 0, %s19
      %p16 = scmp.ge.s32.totalorder %s15, 4
      %s25 = sphi 0, %s27
      %s28 = sphi 0, %s25
      %s29 = sphi 0, %s28
      %s45 = sphi 0, %s29
      %s49 = sphi 0, %s49
      %s51 = sphi 0, %s49
      %s52 = sphi 0, %s51
      %s66 = sphi 0, %s52
      %s70 = sphi 0, %s70
      %s72 = sphi 0, %s70
      %s73 = sphi 0, %s72
      %s87 = sphi 0, %s73
      %s93 = sphi 0, %s95
      %s96 = sphi 0, %s93
      %s97 = sphi 0, %s96
      %s113 = sphi 0, %s97
    $region4: #{tpu_custom_call.1} parent=1 // loop_header_branch
      %18 = sbr.rel (%p16) target = $region8
    $region5: #{tpu_custom_call.1} parent=1 // loop_body
      %s20 = ssub.s32 %s15, 1
      %s21 = ssub.s32 %s15, 2
      %s22 = sadd.s32 %s15, 1
      %s23 = ssub.s32 %s15, %s22
      %p24 = scmp.eq.s32.totalorder %s23, 0
      %s26 = sadd.s32 %s25, 1
      %s27 = scalar_select %p24, %s25, %s26
      %p30 = pneg %p24
      %p31 = scmp.eq.s32.totalorder %s15, 1
      %p32 = por %p30, %p31
      %p33 = scmp.ne.s32.totalorder %s25, %s28
      %p34 = scmp.eq.s32.totalorder %s15, 0
      %p35 = por %p33, %p34
      %p36 = scmp.ne.s32.totalorder %s25, %s28
      %p37 = scmp.eq.s32.totalorder %s20, 1
      %p38 = por %p36, %p37
      %p39 = scmp.ne.s32.totalorder %s28, %s29
      %p40 = scmp.eq.s32.totalorder %s20, 0
      %p41 = por %p39, %p40
      %p42 = scmp.ne.s32.totalorder %s28, %s29
      %p43 = scmp.eq.s32.totalorder %s21, 1
      %p44 = por %p42, %p43
      %p46 = scmp.ne.s32.totalorder %s29, %s45
      %p47 = scmp.eq.s32.totalorder %s21, 0
      %p48 = por %p46, %p47
      %s50 = sadd.s32 %s49, 1
      %p53 = scmp.eq.s32.totalorder %s15, 1
      %p54 = scmp.ne.s32.totalorder %s49, %s51
      %p55 = scmp.eq.s32.totalorder %s15, 0
      %p56 = por %p54, %p55
      %p57 = scmp.ne.s32.totalorder %s49, %s51
      %p58 = scmp.eq.s32.totalorder %s20, 1
      %p59 = por %p57, %p58
      %p60 = scmp.ne.s32.totalorder %s51, %s52
      %p61 = scmp.eq.s32.totalorder %s20, 0
      %p62 = por %p60, %p61
      %p63 = scmp.ne.s32.totalorder %s51, %s52
      %p64 = scmp.eq.s32.totalorder %s21, 1
      %p65 = por %p63, %p64
      %p67 = scmp.ne.s32.totalorder %s52, %s66
      %p68 = scmp.eq.s32.totalorder %s21, 0
      %p69 = por %p67, %p68
      %s71 = sadd.s32 %s70, 1
      %p74 = scmp.eq.s32.totalorder %s15, 1
      %p75 = scmp.ne.s32.totalorder %s70, %s72
      %p76 = scmp.eq.s32.totalorder %s15, 0
      %p77 = por %p75, %p76
      %p78 = scmp.ne.s32.totalorder %s70, %s72
      %p79 = scmp.eq.s32.totalorder %s20, 1
      %p80 = por %p78, %p79
      %p81 = scmp.ne.s32.totalorder %s72, %s73
      %p82 = scmp.eq.s32.totalorder %s20, 0
      %p83 = por %p81, %p82
      %p84 = scmp.ne.s32.totalorder %s72, %s73
      %p85 = scmp.eq.s32.totalorder %s21, 1
      %p86 = por %p84, %p85
      %p88 = scmp.ne.s32.totalorder %s73, %s87
      %p89 = scmp.eq.s32.totalorder %s21, 0
      %p90 = por %p88, %p89
      %s91 = ssub.s32 %s15, %s22
      %p92 = scmp.eq.s32.totalorder %s91, 0
      %s94 = sadd.s32 %s93, 1
      %s95 = scalar_select %p92, %s93, %s94
      %p98 = pneg %p92
      %p99 = scmp.eq.s32.totalorder %s15, 1
      %p100 = por %p98, %p99
      %p101 = scmp.ne.s32.totalorder %s93, %s96
      %p102 = scmp.eq.s32.totalorder %s15, 0
      %p103 = por %p101, %p102
      %p104 = scmp.ne.s32.totalorder %s93, %s96
      %p105 = scmp.eq.s32.totalorder %s20, 1
      %p106 = por %p104, %p105
      %p107 = scmp.ne.s32.totalorder %s96, %s97
      %p108 = scmp.eq.s32.totalorder %s20, 0
      %p109 = por %p107, %p108
      %p110 = scmp.ne.s32.totalorder %s96, %s97
      %p111 = scmp.eq.s32.totalorder %s21, 1
      %p112 = por %p110, %p111
      %p114 = scmp.ne.s32.totalorder %s97, %s113
      %p115 = scmp.eq.s32.totalorder %s21, 0
      %p116 = por %p114, %p115
      %p117 = scmp.le.s32.totalorder 1, %s15
      %p118 = scmp.lt.s32.totalorder %s15, 3
      %p119 = pnand %p117, %p118
      %p120 = pneg %p119
      // Predicated region
      $region9: #{tpu_custom_call.1} parent=5 // pred_check
        _
      $region10: #{tpu_custom_call.1} parent=5 // pred_check_branch
        %122 = sbr.rel (%p119) target = $region12
      $region11: #{tpu_custom_call.1} parent=5 // pred_region
        %s123 = ssub.s32 %s15, 1
        // Predicated region
        $region13: #{tpu_custom_call.1} parent=11 // pred_check
          %p124 = pneg %p62
        $region14: #{tpu_custom_call.1} parent=11 // pred_check_branch
          %126 = sbr.rel (%p124) target = $region16
        $region15: #{tpu_custom_call.1} parent=11 // pred_region
          _
        $region16: #{tpu_custom_call.1} parent=11 // pred_fallthru
          _
        // Predicated region
        $region17: #{tpu_custom_call.1} parent=11 // pred_check
          %p127 = pneg %p83
        $region18: #{tpu_custom_call.1} parent=11 // pred_check_branch
          %129 = sbr.rel (%p127) target = $region20
        $region19: #{tpu_custom_call.1} parent=11 // pred_region
          _
        $region20: #{tpu_custom_call.1} parent=11 // pred_fallthru
          _
      $region12: #{tpu_custom_call.1} parent=5 // pred_fallthru
        _
      %p130 = scmp.lt.s32.totalorder %s15, 2
      // Predicated region
      $region21: #{tpu_custom_call.1} parent=5 // pred_check
        %p131 = pneg %p130
      $region22: #{tpu_custom_call.1} parent=5 // pred_check_branch
        %133 = sbr.rel (%p131) target = $region24
      $region23: #{tpu_custom_call.1} parent=5 // pred_region
        // Predicated region
        $region25: #{tpu_custom_call.1} parent=23 // pred_check
          %p134 = pneg %p35
        $region26: #{tpu_custom_call.1} parent=23 // pred_check_branch
          %136 = sbr.rel (%p134) target = $region28
        $region27: #{tpu_custom_call.1} parent=23 // pred_region
          %s137 = sand.u32 %s25, 1
          %s138 = scalar_lea.sflag [#allocation3], %s137
          %s139 = sand.u32 %s25, 1
          %s140 = smul.addr %s139, 4
          %s141 = scalar_lea.vmem [#allocation2], %s140
          %s142 = smul.u32 4, %s15
          %144 = vsyncadd %s138, 0
          %s145 = scalar_lea.hbm %s0, %s142
          %s147 = sshll.u32 %s145, 4
          %s148 = int_to_ptr.hbm [resolvable:$true] %s147
          %s149 = sshll.u32 %s141, 4
          %s150 = int_to_ptr.vmem [resolvable:$true] %s149
          %152 = dma.hbm_to_vmem [thread:$0]  %s148, 64, %s150, %s138
        $region28: #{tpu_custom_call.1} parent=23 // pred_fallthru
          _
      $region24: #{tpu_custom_call.1} parent=5 // pred_fallthru
        _
      %p153 = scmp.le.s32.totalorder 1, %s15
      %p154 = scmp.lt.s32.totalorder %s15, 3
      %p155 = pnand %p153, %p154
      %p156 = pneg %p155
      // Predicated region
      $region29: #{tpu_custom_call.1} parent=5 // pred_check
        _
      $region30: #{tpu_custom_call.1} parent=5 // pred_check_branch
        %158 = sbr.rel (%p155) target = $region32
      $region31: #{tpu_custom_call.1} parent=5 // pred_region
        %s159 = ssub.s32 %s15, 1
        %s160 = sand.u32 %s28, 1
        %s161 = scalar_lea.sflag [#allocation3], %s160
        %s162 = sand.u32 %s28, 1
        %s163 = smul.addr %s162, 4
        %s164 = scalar_lea.vmem [#allocation2], %s163
        // Predicated region
        $region33: #{tpu_custom_call.1} parent=31 // pred_check
          %p165 = pneg %p41
        $region34: #{tpu_custom_call.1} parent=31 // pred_check_branch
          %167 = sbr.rel (%p165) target = $region36
        $region35: #{tpu_custom_call.1} parent=31 // pred_region
          %169 = dma.done %s161, 64
        $region36: #{tpu_custom_call.1} parent=31 // pred_fallthru
          _
        %s170 = sand.u32 %s28, 1
        %s171 = scalar_lea.sflag [#allocation3], %s170
        %s172 = sand.u32 %s28, 1
        %s173 = smul.addr %s172, 4
        %s174 = scalar_lea.vmem [#allocation2], %s173
        %p175 = pneg %p41
        %p176 = pneg %p38
        %p177 = pneg %p62
        %p178 = pneg %p59
        %p179 = pneg %p83
        %p180 = pneg %p80
        %p181 = pneg %p109
        %p182 = pneg %p106
        %s183 = sand.u32 %s96, 1
        %s184 = scalar_lea.sflag [#allocation4], %s183
        %s185 = sand.u32 %s96, 1
        %s186 = smul.addr %s185, 4
        %s187 = scalar_lea.vmem [#allocation5], %s186
        %s188 = smul.u32 4, %s20
        %s189 = smul.u32 4, %s20
        %v190 = vld [vmem:[%s164] sm:$0xf]
        %v191 = vld [vmem:[%s1] sm:$0xff]
        %v192 = vld [vmem:[%s1 + $0x8] sm:$0xff]
        %v193 = vld [vmem:[%s1 + $0x10] sm:$0xff]
        %v194 = vld [vmem:[%s1 + $0x18] sm:$0xff]
        %196 = vset.pattern.permute.xlu0 0
        %197 = vperm.xlu0 %196, %v191
        %v198 = vpop.permute.xlu0 %197
        %201 = vset.pattern.permute.xlu0 0
        %202 = vperm.xlu0 %201, %v192
        %v203 = vpop.permute.xlu0 %202
        %206 = vset.pattern.permute.xlu0 0
        %207 = vperm.xlu0 %206, %v193
        %v208 = vpop.permute.xlu0 %207
        %211 = vset.pattern.permute.xlu0 0
        %212 = vperm.xlu0 %211, %v194
        %v213 = vpop.permute.xlu0 %212
        %v216 = vperm.slane %v190, 0
        %v217 = vperm.slane %v190, 1
        %v218 = vperm.slane %v190, 2
        %v219 = vperm.slane %v190, 3
        %v224 = vmul.f32 %v198, %v216
        %v225 = vmul.f32 %v198, %v217
        %v226 = vmul.f32 %v198, %v218
        %v227 = vmul.f32 %v198, %v219
        %v228 = vmul.f32 %v203, %v216
        %v229 = vmul.f32 %v203, %v217
        %v230 = vmul.f32 %v203, %v218
        %v231 = vmul.f32 %v203, %v219
        %v232 = vmul.f32 %v208, %v216
        %v233 = vmul.f32 %v208, %v217
        %v234 = vmul.f32 %v208, %v218
        %v235 = vmul.f32 %v208, %v219
        %v236 = vmul.f32 %v213, %v216
        %v237 = vmul.f32 %v213, %v217
        %v238 = vmul.f32 %v213, %v218
        %v239 = vmul.f32 %v213, %v219
        %v240 = vld [vmem:[%s2] sm:$0xff]
        %v241 = vld [vmem:[%s2 + $0x8] sm:$0xff]
        %v242 = vld [vmem:[%s2 + $0x10] sm:$0xff]
        %v243 = vld [vmem:[%s2 + $0x18] sm:$0xff]
        %245 = vset.pattern.permute.xlu0 0
        %246 = vperm.xlu0 %245, %v240
        %v247 = vpop.permute.xlu0 %246
        %250 = vset.pattern.permute.xlu0 0
        %251 = vperm.xlu0 %250, %v241
        %v252 = vpop.permute.xlu0 %251
        %255 = vset.pattern.permute.xlu0 0
        %256 = vperm.xlu0 %255, %v242
        %v257 = vpop.permute.xlu0 %256
        %260 = vset.pattern.permute.xlu0 0
        %261 = vperm.xlu0 %260, %v243
        %v262 = vpop.permute.xlu0 %261
        %v264 = vadd.f32 %v224, %v247
        %v265 = vadd.f32 %v225, %v247
        %v266 = vadd.f32 %v226, %v247
        %v267 = vadd.f32 %v227, %v247
        %v268 = vadd.f32 %v228, %v252
        %v269 = vadd.f32 %v229, %v252
        %v270 = vadd.f32 %v230, %v252
        %v271 = vadd.f32 %v231, %v252
        %v272 = vadd.f32 %v232, %v257
        %v273 = vadd.f32 %v233, %v257
        %v274 = vadd.f32 %v234, %v257
        %v275 = vadd.f32 %v235, %v257
        %v276 = vadd.f32 %v236, %v262
        %v277 = vadd.f32 %v237, %v262
        %v278 = vadd.f32 %v238, %v262
        %v279 = vadd.f32 %v239, %v262
        %v280 = vtanh.pop %v264
        %v281 = vtanh.pop %v265
        %v282 = vtanh.pop %v266
        %v283 = vtanh.pop %v267
        %v284 = vtanh.pop %v268
        %v285 = vtanh.pop %v269
        %v286 = vtanh.pop %v270
        %v287 = vtanh.pop %v271
        %v288 = vtanh.pop %v272
        %v289 = vtanh.pop %v273
        %v290 = vtanh.pop %v274
        %v291 = vtanh.pop %v275
        %v292 = vtanh.pop %v276
        %v293 = vtanh.pop %v277
        %v294 = vtanh.pop %v278
        %v295 = vtanh.pop %v279
        %s296 = scalar_lea.vmem %s1, 32
        %v297 = vld [vmem:[%s296] sm:$0xff]
        %v298 = vld [vmem:[%s296 + $0x8] sm:$0xff]
        %v299 = vld [vmem:[%s296 + $0x10] sm:$0xff]
        %v300 = vld [vmem:[%s296 + $0x18] sm:$0xff]
        %s301 = scalar_lea.vmem %s2, 32
        %v302 = vld [vmem:[%s301] sm:$0xff]
        %v303 = vld [vmem:[%s301 + $0x8] sm:$0xff]
        %v304 = vld [vmem:[%s301 + $0x10] sm:$0xff]
        %v305 = vld [vmem:[%s301 + $0x18] sm:$0xff]
        %307 = vset.pattern.permute.xlu0 0
        %308 = vperm.xlu0 %307, %v302
        %v309 = vpop.permute.xlu0 %308
        %312 = vset.pattern.permute.xlu0 0
        %313 = vperm.xlu0 %312, %v303
        %v314 = vpop.permute.xlu0 %313
        %317 = vset.pattern.permute.xlu0 0
        %318 = vperm.xlu0 %317, %v304
        %v319 = vpop.permute.xlu0 %318
        %322 = vset.pattern.permute.xlu0 0
        %323 = vperm.xlu0 %322, %v305
        %v324 = vpop.permute.xlu0 %323
        %vm326 = vcmask 261120
        %v328 = vsel %vm326, %v297, 0
        %v331 = vsel %vm326, %v298, 0
        %v334 = vsel %vm326, %v299, 0
        %v337 = vsel %vm326, %v300, 0
        %339 = vmatpush.msra.mxu0 0.0
        %340 = vmatpush.msra.mxu0 0.0
        %341 = vmatpush.msra.mxu0 0.0
        %342 = vmatpush.msra.mxu0 0.0
        %343 = vmatpush.msra.mxu0 0.0
        %344 = vmatpush.msra.mxu0 0.0
        %345 = vmatpush.msra.mxu0 0.0
        %346 = vmatpush.msra.mxu0 0.0
        %347 = vmatpush.msra.mxu0 0.0
        %348 = vmatpush.msra.mxu0 0.0
        %349 = vmatpush.msra.mxu0 0.0
        %350 = vmatpush.msra.mxu0 0.0
        %351 = vmatpush.msra.mxu0 %v292
        %352 = vmatpush.msra.mxu0 %v288
        %353 = vmatpush.msra.mxu0 %v284
        %354 = vmatpush.msra.mxu0 %v280
        %355 = vmatmul.f32.gmra.mxu0 %v328
        %v356 = vpop.f32.mrf.mxu0
        %v357 = vadd.f32 %v309, %v356
        %358 = vmatmul.f32.gmra.mxu0 %v331
        %v359 = vpop.f32.mrf.mxu0
        %v360 = vadd.f32 %v314, %v359
        %361 = vmatmul.f32.gmra.mxu0 %v334
        %v362 = vpop.f32.mrf.mxu0
        %v363 = vadd.f32 %v319, %v362
        %364 = vmatmul.f32.gmra.mxu0 %v337
        %v365 = vpop.f32.mrf.mxu0
        %v366 = vadd.f32 %v324, %v365
        %367 = vdwg.mxu0
        %368 = vmatpush.msra.mxu0 0.0
        %369 = vmatpush.msra.mxu0 0.0
        %370 = vmatpush.msra.mxu0 0.0
        %371 = vmatpush.msra.mxu0 0.0
        %372 = vmatpush.msra.mxu0 0.0
        %373 = vmatpush.msra.mxu0 0.0
        %374 = vmatpush.msra.mxu0 0.0
        %375 = vmatpush.msra.mxu0 0.0
        %376 = vmatpush.msra.mxu0 0.0
        %377 = vmatpush.msra.mxu0 0.0
        %378 = vmatpush.msra.mxu0 0.0
        %379 = vmatpush.msra.mxu0 0.0
        %380 = vmatpush.msra.mxu0 %v293
        %381 = vmatpush.msra.mxu0 %v289
        %382 = vmatpush.msra.mxu0 %v285
        %383 = vmatpush.msra.mxu0 %v281
        %384 = vmatmul.f32.gmra.mxu0 %v328
        %v385 = vpop.f32.mrf.mxu0
        %v386 = vadd.f32 %v309, %v385
        %387 = vmatmul.f32.gmra.mxu0 %v331
        %v388 = vpop.f32.mrf.mxu0
        %v389 = vadd.f32 %v314, %v388
        %390 = vmatmul.f32.gmra.mxu0 %v334
        %v391 = vpop.f32.mrf.mxu0
        %v392 = vadd.f32 %v319, %v391
        %393 = vmatmul.f32.gmra.mxu0 %v337
        %v394 = vpop.f32.mrf.mxu0
        %v395 = vadd.f32 %v324, %v394
        %396 = vdwg.mxu0
        %397 = vmatpush.msra.mxu0 0.0
        %398 = vmatpush.msra.mxu0 0.0
        %399 = vmatpush.msra.mxu0 0.0
        %400 = vmatpush.msra.mxu0 0.0
        %401 = vmatpush.msra.mxu0 0.0
        %402 = vmatpush.msra.mxu0 0.0
        %403 = vmatpush.msra.mxu0 0.0
        %404 = vmatpush.msra.mxu0 0.0
        %405 = vmatpush.msra.mxu0 0.0
        %406 = vmatpush.msra.mxu0 0.0
        %407 = vmatpush.msra.mxu0 0.0
        %408 = vmatpush.msra.mxu0 0.0
        %409 = vmatpush.msra.mxu0 %v294
        %410 = vmatpush.msra.mxu0 %v290
        %411 = vmatpush.msra.mxu0 %v286
        %412 = vmatpush.msra.mxu0 %v282
        %413 = vmatmul.f32.gmra.mxu0 %v328
        %v414 = vpop.f32.mrf.mxu0
        %v415 = vadd.f32 %v309, %v414
        %416 = vmatmul.f32.gmra.mxu0 %v331
        %v417 = vpop.f32.mrf.mxu0
        %v418 = vadd.f32 %v314, %v417
        %419 = vmatmul.f32.gmra.mxu0 %v334
        %v420 = vpop.f32.mrf.mxu0
        %v421 = vadd.f32 %v319, %v420
        %422 = vmatmul.f32.gmra.mxu0 %v337
        %v423 = vpop.f32.mrf.mxu0
        %v424 = vadd.f32 %v324, %v423
        %425 = vdwg.mxu0
        %426 = vmatpush.msra.mxu0 0.0
        %427 = vmatpush.msra.mxu0 0.0
        %428 = vmatpush.msra.mxu0 0.0
        %429 = vmatpush.msra.mxu0 0.0
        %430 = vmatpush.msra.mxu0 0.0
        %431 = vmatpush.msra.mxu0 0.0
        %432 = vmatpush.msra.mxu0 0.0
        %433 = vmatpush.msra.mxu0 0.0
        %434 = vmatpush.msra.mxu0 0.0
        %435 = vmatpush.msra.mxu0 0.0
        %436 = vmatpush.msra.mxu0 0.0
        %437 = vmatpush.msra.mxu0 0.0
        %438 = vmatpush.msra.mxu0 %v295
        %439 = vmatpush.msra.mxu0 %v291
        %440 = vmatpush.msra.mxu0 %v287
        %441 = vmatpush.msra.mxu0 %v283
        %442 = vmatmul.f32.gmra.mxu0 %v328
        %v443 = vpop.f32.mrf.mxu0
        %v444 = vadd.f32 %v309, %v443
        %445 = vmatmul.f32.gmra.mxu0 %v331
        %v446 = vpop.f32.mrf.mxu0
        %v447 = vadd.f32 %v314, %v446
        %448 = vmatmul.f32.gmra.mxu0 %v334
        %v449 = vpop.f32.mrf.mxu0
        %v450 = vadd.f32 %v319, %v449
        %451 = vmatmul.f32.gmra.mxu0 %v337
        %v452 = vpop.f32.mrf.mxu0
        %v453 = vadd.f32 %v324, %v452
        %454 = vdwg.mxu0
        %v455 = vtanh.pop %v357
        %v456 = vtanh.pop %v386
        %v457 = vtanh.pop %v415
        %v458 = vtanh.pop %v444
        %v459 = vtanh.pop %v360
        %v460 = vtanh.pop %v389
        %v461 = vtanh.pop %v418
        %v462 = vtanh.pop %v447
        %v463 = vtanh.pop %v363
        %v464 = vtanh.pop %v392
        %v465 = vtanh.pop %v421
        %v466 = vtanh.pop %v450
        %v467 = vtanh.pop %v366
        %v468 = vtanh.pop %v395
        %v469 = vtanh.pop %v424
        %v470 = vtanh.pop %v453
        %s471 = scalar_lea.vmem %s1, 64
        %v472 = vld [vmem:[%s471] sm:$0xff]
        %v473 = vld [vmem:[%s471 + $0x8] sm:$0xff]
        %v474 = vld [vmem:[%s471 + $0x10] sm:$0xff]
        %v475 = vld [vmem:[%s471 + $0x18] sm:$0xff]
        %477 = vset.pattern.permute.xlu0 0
        %478 = vperm.xlu0 %477, %v472
        %v479 = vpop.permute.xlu0 %478
        %482 = vset.pattern.permute.xlu0 0
        %483 = vperm.xlu0 %482, %v473
        %v484 = vpop.permute.xlu0 %483
        %487 = vset.pattern.permute.xlu0 0
        %488 = vperm.xlu0 %487, %v474
        %v489 = vpop.permute.xlu0 %488
        %492 = vset.pattern.permute.xlu0 0
        %493 = vperm.xlu0 %492, %v475
        %v494 = vpop.permute.xlu0 %493
        %v496 = vmul.f32 %v479, %v455
        %v497 = vmul.f32 %v479, %v456
        %v498 = vmul.f32 %v479, %v457
        %v499 = vmul.f32 %v479, %v458
        %v500 = vmul.f32 %v484, %v459
        %v501 = vmul.f32 %v484, %v460
        %v502 = vmul.f32 %v484, %v461
        %v503 = vmul.f32 %v484, %v462
        %v504 = vmul.f32 %v489, %v463
        %v505 = vmul.f32 %v489, %v464
        %v506 = vmul.f32 %v489, %v465
        %v507 = vmul.f32 %v489, %v466
        %v508 = vmul.f32 %v494, %v467
        %v509 = vmul.f32 %v494, %v468
        %v510 = vmul.f32 %v494, %v469
        %v511 = vmul.f32 %v494, %v470
        %v512 = vadd.f32 %v496, %v500
        %v513 = vadd.f32 %v512, %v504
        %v514 = vadd.f32 %v513, %v508
        %v515 = vrot.slane %v514, 4
        %v516 = vadd.f32 %v514, %v515
        %v517 = vrot.slane %v516, 2
        %v518 = vadd.f32 %v516, %v517
        %v519 = vrot.slane %v518, 1
        %v520 = vadd.f32 %v518, %v519
        %v521 = vadd.f32 %v497, %v501
        %v522 = vadd.f32 %v521, %v505
        %v523 = vadd.f32 %v522, %v509
        %v524 = vrot.slane %v523, 4
        %v525 = vadd.f32 %v523, %v524
        %v526 = vrot.slane %v525, 2
        %v527 = vadd.f32 %v525, %v526
        %v528 = vrot.slane %v527, 1
        %v529 = vadd.f32 %v527, %v528
        %v530 = vadd.f32 %v498, %v502
        %v531 = vadd.f32 %v530, %v506
        %v532 = vadd.f32 %v531, %v510
        %v533 = vrot.slane %v532, 4
        %v534 = vadd.f32 %v532, %v533
        %v535 = vrot.slane %v534, 2
        %v536 = vadd.f32 %v534, %v535
        %v537 = vrot.slane %v536, 1
        %v538 = vadd.f32 %v536, %v537
        %v539 = vadd.f32 %v499, %v503
        %v540 = vadd.f32 %v539, %v507
        %v541 = vadd.f32 %v540, %v511
        %v542 = vrot.slane %v541, 4
        %v543 = vadd.f32 %v541, %v542
        %v544 = vrot.slane %v543, 2
        %v545 = vadd.f32 %v543, %v544
        %v546 = vrot.slane %v545, 1
        %v547 = vadd.f32 %v545, %v546
        %s548 = scalar_lea.vmem %s2, 64
        %v549 = vld [vmem:[%s548] sm:$0x1]
        %551 = vset.pattern.permute.xlu0 0
        %552 = vperm.xlu0 %551, %v549
        %v553 = vpop.permute.xlu0 %552
        %v555 = vadd.f32 %v520, %v553
        %v556 = vadd.f32 %v529, %v553
        %v557 = vadd.f32 %v538, %v553
        %v558 = vadd.f32 %v547, %v553
        %v563 = vrot.slane %v556, 7
        %v564 = vrot.slane %v557, 6
        %v565 = vrot.slane %v558, 5
        %vm566 = vcmask 1040384
        %v567 = vsel %vm566, %v555, %v563
        %vm568 = vcmask 1042434
        %v569 = vsel %vm568, %v564, %v565
        %vm570 = vcmask 1041408
        %v571 = vsel %vm570, %v567, %v569
        %v573 = vlaneseq
        %vm574 = vcmp.ge.s32.totalorder %v573, 0
        %vm575 = vcmp.lt.s32.totalorder %v573, 512
        %vm576 = vmand %vm574, %vm575
        %577 = vst.msk [vmem:[%s187] sm:$0xf] %vm576, %v571
        %s578 = sand.u32 %s96, 1
        %s579 = scalar_lea.sflag [#allocation4], %s578
        %s580 = sand.u32 %s96, 1
        %s581 = smul.addr %s580, 4
        %s582 = scalar_lea.vmem [#allocation5], %s581
        // Predicated region
        $region37: #{tpu_custom_call.1} parent=31 // pred_check
          %p583 = pneg %p106
        $region38: #{tpu_custom_call.1} parent=31 // pred_check_branch
          %585 = sbr.rel (%p583) target = $region40
        $region39: #{tpu_custom_call.1} parent=31 // pred_region
          %s586 = smul.u32 4, %s20
          %588 = vsyncadd %s579, 0
          %s589 = scalar_lea.hbm %s3, %s586
          %s591 = sshll.u32 %s582, 4
          %s592 = int_to_ptr.vmem [resolvable:$true] %s591
          %s593 = sshll.u32 %s589, 4
          %s594 = int_to_ptr.hbm [resolvable:$true] %s593
          %596 = dma.vmem_to_hbm [thread:$0]  %s592, 64, %s594, %s579
        $region40: #{tpu_custom_call.1} parent=31 // pred_fallthru
          _
      $region32: #{tpu_custom_call.1} parent=5 // pred_fallthru
        _
      %p597 = scmp.le.s32.totalorder 2, %s15
      // Predicated region
      $region41: #{tpu_custom_call.1} parent=5 // pred_check
        %p598 = pneg %p597
      $region42: #{tpu_custom_call.1} parent=5 // pred_check_branch
        %600 = sbr.rel (%p598) target = $region44
      $region43: #{tpu_custom_call.1} parent=5 // pred_region
        %s601 = ssub.s32 %s15, 2
        // Predicated region
        $region45: #{tpu_custom_call.1} parent=43 // pred_check
          %p602 = pneg %p112
        $region46: #{tpu_custom_call.1} parent=43 // pred_check_branch
          %604 = sbr.rel (%p602) target = $region48
        $region47: #{tpu_custom_call.1} parent=43 // pred_region
          %s605 = sand.u32 %s97, 1
          %s606 = scalar_lea.sflag [#allocation4], %s605
          %s607 = sand.u32 %s97, 1
          %s608 = smul.addr %s607, 4
          %s609 = scalar_lea.vmem [#allocation5], %s608
          %611 = dma.done %s606, 64
        $region48: #{tpu_custom_call.1} parent=43 // pred_fallthru
          _
      $region44: #{tpu_custom_call.1} parent=5 // pred_fallthru
        _
    $region6: #{tpu_custom_call.1} parent=1 // loop_footer
      %s19 = sadd.s32 1, %s15
    $region7: #{tpu_custom_call.1} parent=1 // loop_footer_branch
      %14 = sbr.rel target = $region3
    $region8: #{tpu_custom_call.1} parent=1 // loop_exit
      _
    %612 = vsyncpa [#allocation3], 1
    %s613 = scalar_lea.sflag [#allocation3], 1
    %614 = vsyncpa %s613, 1
    %615 = vsyncpa [#allocation4], 1
    %s616 = scalar_lea.sflag [#allocation4], 1
    %617 = vsyncpa %s616, 1

</llo_original>
